<compile_context>
chip_gen: v5e
topology: v5e:2x2
jax: 0.10.0
libtpu: 0.0.40
codegen_flags: <defaults>
</compile_context>

<pallas_src>
import jax
import jax.numpy as jnp
from jax.experimental import pallas as pl
from jax.experimental.pallas import tpu as pltpu

_LANE = 128     # lane width (last dim granularity)
_SUBLANE = 8    # f32 sublane granularity (second-to-last dim)


def _round_up(n: int, m: int) -> int:
    return (n + m - 1) // m * m


def _pad_to(a, shape):
    pads = [(0, t - s) for s, t in zip(a.shape, shape)]
    if all(p == (0, 0) for p in pads):
        return a
    return jnp.pad(a, pads)


def _mlp_kernel(x_ref, w1_ref, b1_ref, w2_ref, b2_ref, w3_ref, b3_ref, o_ref):
    # fc1 + ReLU.  In-register cast of x to the weights' (possibly bf16) dtype
    # feeds the MXU; accumulation is f32; bias add / ReLU are f32 on the VPU.
    x = x_ref[...].astype(w1_ref.dtype)
    h1 = jnp.dot(x, w1_ref[...], preferred_element_type=jnp.float32)
    h1 = jnp.maximum(h1 + b1_ref[...], 0.0)
    # fc2 (no activation, per the reference forward)
    h2 = jnp.dot(h1.astype(w2_ref.dtype), w2_ref[...],
                 preferred_element_type=jnp.float32) + b2_ref[...]
    # fc3 (no activation)
    out = jnp.dot(h2.astype(w3_ref.dtype), w3_ref[...],
                  preferred_element_type=jnp.float32) + b3_ref[...]
    o_ref[...] = out.astype(o_ref.dtype)


def pack_params(params, *, compute_dtype=jnp.float32):
    """One-time parameter packing (hoisted out of the per-call path).

    Weights are stored (in, out), i.e. PyTorch's W.T.  Only the *internal*
    hidden dims are zero-padded to 128 lanes; the input width K and output
    width N stay natural so x / output HBM traffic is never inflated.
    Weights are cast to `compute_dtype` (what feeds the MXU); biases stay f32.
    """
    w1, b1, w2, b2, w3, b3 = params
    b1, b2, b3 = (b.reshape(1, -1) for b in (b1, b2, b3))
    K, H1 = w1.shape
    H2 = w2.shape[1]
    N = w3.shape[1]
    H1p, H2p = _round_up(H1, _LANE), _round_up(H2, _LANE)
    w1p = _pad_to(w1, (K, H1p)).astype(compute_dtype)
    w2p = _pad_to(w2, (H1p, H2p)).astype(compute_dtype)
    w3p = _pad_to(w3, (H2p, N)).astype(compute_dtype)
    b1p = _pad_to(b1, (1, H1p)).astype(jnp.float32)
    b2p = _pad_to(b2, (1, H2p)).astype(jnp.float32)
    b3p = _pad_to(b3, (1, N)).astype(jnp.float32)
    return (w1p, b1p, w2p, b2p, w3p, b3p)


def weight_nn_forward(x, packed_params, *, batch_tile=512):
    """Fused 3-layer MLP forward.  `packed_params` come from pack_params()."""
    w1p, b1p, w2p, b2p, w3p, b3p = packed_params
    B, K = x.shape
    assert w1p.shape[0] == K, "x feature dim must match packed w1"
    H1p, H2p = w1p.shape[1], w2p.shape[1]
    N = w3p.shape[1]
    compute_dtype = w1p.dtype
    out_dtype = x.dtype

    # ---- batch tiling ------------------------------------------------------
    # Sublane multiple: 8 for f32, 16 for bf16 compute (packed rows per vreg).
    sub = max(_SUBLANE,
              32 // jnp.dtype(compute_dtype).itemsize,
              32 // jnp.dtype(x.dtype).itemsize)
    num_tiles = max(int(pl.cdiv(B, batch_tile)), 1)
    if num_tiles < 2 and B > sub:
        num_tiles = 2                       # give v7x's 2nd TensorCore work
    TB = _round_up(int(pl.cdiv(B, num_tiles)), sub)   # balanced tiles
    TB = min(TB, _round_up(B, _SUBLANE))    # never overshoot batch by >1 sublane group
    grid_b = int(pl.cdiv(B, TB))            # partial last block handled by Pallas

    # ---- VMEM budget (generation-aware) -------------------------------------
    def _tile_bytes(shape, itemsize):
        return _round_up(shape[-2], _SUBLANE) * _round_up(shape[-1], _LANE) * itemsize

    xb = jnp.dtype(x.dtype).itemsize
    ob = jnp.dtype(out_dtype).itemsize
    resident = sum(_tile_bytes(a.shape, a.dtype.itemsize)
                   for a in (w1p, b1p, w2p, b2p, w3p, b3p))
    est = (2 * _tile_bytes((TB, K), xb)       # x tiles (double-buffered)
           + 2 * _tile_bytes((TB, N), ob)     # out tiles (double-buffered)
           + 2 * resident                     # weights/biases (worst case 2 bufs)
           + _tile_bytes((TB, H1p), 4)        # f32 intermediate h1
           + _tile_bytes((TB, H2p), 4))       # f32 intermediate h2
    try:  # ~48 MiB cap on v7x (64 MiB physical), ~96 MiB on v5e/v6e (128 MiB)
        vmem_cap = int(pltpu.get_tpu_info().vmem_capacity_bytes)
    except Exception:
        vmem_cap = 64 * 1024 * 1024
    vmem_limit = int(min(max(2 * est, 4 * 1024 * 1024), (vmem_cap * 3) // 4))
    # TODO(synk): if resident weights ever exceed ~half of VMEM (very large
    # hidden sizes on v7x's 64 MiB), stream them over an "arbitrary" reduction
    # grid axis instead of keeping them VMEM-resident.

    cost = pl.CostEstimate(
        flops=int(2 * B * (K * H1p + H1p * H2p + H2p * N)),
        transcendentals=0,
        bytes_accessed=int(B * K * xb + B * N * ob + resident),
    )

    def _build(use_buffered_residents):
        def wspec(a):
            kw = {"pipeline_mode": pl.Buffered(1)} if use_buffered_residents else {}
            # Constant index_map: stays VMEM-resident, never re-DMAed per step.
            return pl.BlockSpec(a.shape, lambda i: (0,) * a.ndim, **kw)

        return pl.pallas_call(
            _mlp_kernel,
            out_shape=jax.ShapeDtypeStruct((B, N), out_dtype),
            grid=(grid_b,),
            in_specs=[
                pl.BlockSpec((TB, K), lambda i: (i, 0)),   # x: batch-tiled, natural K
                wspec(w1p), wspec(b1p),
                wspec(w2p), wspec(b2p),
                wspec(w3p), wspec(b3p),
            ],
            # natural-N output (narrow masked store is cheap: compute has slack)
            out_specs=pl.BlockSpec((TB, N), lambda i: (i, 0)),
            compiler_params=pltpu.CompilerParams(
                dimension_semantics=("parallel",),          # megacore / 2-TC sharding
                vmem_limit_bytes=vmem_limit,
            ),
            cost_estimate=cost,
        )

    args = (x, w1p, b1p, w2p, b2p, w3p, b3p)
    try:
        return _build(True)(*args)
    except Exception:
        # Fallback if this JAX build does not honor Buffered(1) on top-level
        # pallas_call BlockSpecs (difference is VMEM footprint, not numerics).
        return _build(False)(*args)


def init_params(key, input_size, hidden_sizes, output_size, dtype=jnp.float32):
    """nn.Linear-style init; weights stored transposed (in, out), bias (1, out)."""
    dims = [input_size, hidden_sizes[0], hidden_sizes[1], output_size]
    params = []
    for i in range(3):
        fan_in, fan_out = dims[i], dims[i + 1]
        key, kw, kb = jax.random.split(key, 3)
        bound = 1.0 / jnp.sqrt(fan_in)
        w = jax.random.uniform(kw, (fan_in, fan_out), dtype, -bound, bound)
        b = jax.random.uniform(kb, (1, fan_out), dtype, -bound, bound)
        params += [w, b]
    return tuple(params)


def _reference_forward(x, params):
    w1, b1, w2, b2, w3, b3 = params
    h = jnp.maximum(x @ w1 + b1, 0.0)
    h = h @ w2 + b2
    return h @ w3 + b3


if __name__ == "__main__":
    # Small shapes consistent with the module: batch=8, input=32, hidden=[64, 32], output=4.
    batch, input_size, hidden_sizes, output_size = 8, 32, [64, 32], 4

    key = jax.random.PRNGKey(0)
    key, kx = jax.random.split(key)
    x = jax.random.normal(kx, (batch, input_size), jnp.float32)
    params = init_params(key, input_size, hidden_sizes, output_size)

    ref = _reference_forward(x, params)

    # f32 compute path: params packed ONCE, outside the per-call path.
    packed_f32 = pack_params(params, compute_dtype=jnp.float32)
    out = jax.block_until_ready(weight_nn_forward(x, packed_f32))
    assert out.shape == (batch, output_size)
    assert jnp.allclose(out, ref, atol=1e-4, rtol=1e-4), "f32 mismatch vs JAX reference"

    # bf16 compute path (full-rate MXU on v6e/v7x, half the weight DMA bytes);
    # accumulation and bias/ReLU stay f32.
    packed_bf16 = pack_params(params, compute_dtype=jnp.bfloat16)
    out_bf16 = jax.block_until_ready(weight_nn_forward(x, packed_bf16))
    assert out_bf16.shape == (batch, output_size)
    assert jnp.allclose(out_bf16, ref, atol=3e-2, rtol=3e-2), "bf16 mismatch vs JAX reference"

    print("KERNEL_OK")
</pallas_src>

<mosaic_0001>
module attributes {stable_mosaic.version = 11 : i64} {
  func.func @_mlp_kernel(%arg0: i32, %arg1: memref<8x32xf32, #tpu.memory_space<vmem>>, %arg2: memref<32x128xf32, #tpu.memory_space<vmem>>, %arg3: memref<1x128xf32, #tpu.memory_space<vmem>>, %arg4: memref<128x128xf32, #tpu.memory_space<vmem>>, %arg5: memref<1x128xf32, #tpu.memory_space<vmem>>, %arg6: memref<128x4xf32, #tpu.memory_space<vmem>>, %arg7: memref<1x4xf32, #tpu.memory_space<vmem>>, %arg8: memref<8x4xf32, #tpu.memory_space<vmem>>) attributes {dimension_semantics = [#tpu.dimension_semantics<parallel>], iteration_bounds = array<i64: 1>, scalar_prefetch = 0 : i64, scratch_operands = 0 : i64, tpu.core_type = #tpu.core_type<tc>, window_params = [{transform_indices = @transform_0, window_bounds = array<i64: 8, 32>}, {pipeline_mode = #tpu.pipeline_mode<synchronous>, transform_indices = @transform_1, window_bounds = array<i64: 32, 128>}, {pipeline_mode = #tpu.pipeline_mode<synchronous>, transform_indices = @transform_2, window_bounds = array<i64: 1, 128>}, {pipeline_mode = #tpu.pipeline_mode<synchronous>, transform_indices = @transform_3, window_bounds = array<i64: 128, 128>}, {pipeline_mode = #tpu.pipeline_mode<synchronous>, transform_indices = @transform_4, window_bounds = array<i64: 1, 128>}, {pipeline_mode = #tpu.pipeline_mode<synchronous>, transform_indices = @transform_5, window_bounds = array<i64: 128, 4>}, {pipeline_mode = #tpu.pipeline_mode<synchronous>, transform_indices = @transform_6, window_bounds = array<i64: 1, 4>}, {transform_indices = @transform_7, window_bounds = array<i64: 8, 4>}]} {
    %c0 = arith.constant 0 : index
    %c0_0 = arith.constant 0 : index
    %0 = vector.load %arg1[%c0, %c0_0] : memref<8x32xf32, #tpu.memory_space<vmem>>, vector<8x32xf32>
    %c0_1 = arith.constant 0 : index
    %c0_2 = arith.constant 0 : index
    %1 = vector.load %arg2[%c0_1, %c0_2] : memref<32x128xf32, #tpu.memory_space<vmem>>, vector<32x128xf32>
    %cst = arith.constant dense<0.000000e+00> : vector<8x128xf32>
    %2 = tpu.matmul %0, %1, %cst {dimension_numbers = #tpu.dot_dimension_numbers<[1], [0], [0], [1], [0, 0, 1, 1], [], []>} : vector<8x32xf32>, vector<32x128xf32>, vector<8x128xf32> -> vector<8x128xf32>
    %c0_3 = arith.constant 0 : index
    %c0_4 = arith.constant 0 : index
    %3 = vector.load %arg3[%c0_3, %c0_4] : memref<1x128xf32, #tpu.memory_space<vmem>>, vector<1x128xf32>
    %4 = vector.broadcast %3 : vector<1x128xf32> to vector<8x128xf32>
    %5 = arith.addf %2, %4 : vector<8x128xf32>
    %cst_5 = arith.constant 0.000000e+00 : f32
    %6 = vector.broadcast %cst_5 : f32 to vector<8x128xf32>
    %7 = arith.maximumf %5, %6 : vector<8x128xf32>
    %c0_6 = arith.constant 0 : index
    %c0_7 = arith.constant 0 : index
    %8 = vector.load %arg4[%c0_6, %c0_7] : memref<128x128xf32, #tpu.memory_space<vmem>>, vector<128x128xf32>
    %cst_8 = arith.constant dense<0.000000e+00> : vector<8x128xf32>
    %9 = tpu.matmul %7, %8, %cst_8 {dimension_numbers = #tpu.dot_dimension_numbers<[1], [0], [0], [1], [0, 0, 1, 1], [], []>} : vector<8x128xf32>, vector<128x128xf32>, vector<8x128xf32> -> vector<8x128xf32>
    %c0_9 = arith.constant 0 : index
    %c0_10 = arith.constant 0 : index
    %10 = vector.load %arg5[%c0_9, %c0_10] : memref<1x128xf32, #tpu.memory_space<vmem>>, vector<1x128xf32>
    %11 = vector.broadcast %10 : vector<1x128xf32> to vector<8x128xf32>
    %12 = arith.addf %9, %11 : vector<8x128xf32>
    %c0_11 = arith.constant 0 : index
    %c0_12 = arith.constant 0 : index
    %13 = vector.load %arg6[%c0_11, %c0_12] : memref<128x4xf32, #tpu.memory_space<vmem>>, vector<128x4xf32>
    %cst_13 = arith.constant dense<0.000000e+00> : vector<8x4xf32>
    %14 = tpu.matmul %12, %13, %cst_13 {dimension_numbers = #tpu.dot_dimension_numbers<[1], [0], [0], [1], [0, 0, 1, 1], [], []>} : vector<8x128xf32>, vector<128x4xf32>, vector<8x4xf32> -> vector<8x4xf32>
    %c0_14 = arith.constant 0 : index
    %c0_15 = arith.constant 0 : index
    %15 = vector.load %arg7[%c0_14, %c0_15] : memref<1x4xf32, #tpu.memory_space<vmem>>, vector<1x4xf32>
    %16 = vector.broadcast %15 : vector<1x4xf32> to vector<8x4xf32>
    %17 = arith.addf %14, %16 : vector<8x4xf32>
    %c0_16 = arith.constant 0 : index
    %c0_17 = arith.constant 0 : index
    %18 = vector.load %arg8[%c0_16, %c0_17] : memref<8x4xf32, #tpu.memory_space<vmem>>, vector<8x4xf32>
    tpu.vector_store %arg8[%c0_16, %c0_17], %17 {strides = array<i32>} : memref<8x4xf32, #tpu.memory_space<vmem>>, vector<8x4xf32>,
    return
  }
  func.func @transform_0(%arg0: i32) -> (i32, i32) {
    %c0_i32 = arith.constant 0 : i32
    %c0_i32_0 = arith.constant 0 : i32
    return %arg0, %c0_i32 : i32, i32
  }
  func.func @transform_1(%arg0: i32) -> (i32, i32) {
    %c0_i32 = arith.constant 0 : i32
    %c0_i32_0 = arith.constant 0 : i32
    %c0_i32_1 = arith.constant 0 : i32
    return %c0_i32, %c0_i32_0 : i32, i32
  }
  func.func @transform_2(%arg0: i32) -> (i32, i32) {
    %c0_i32 = arith.constant 0 : i32
    %c0_i32_0 = arith.constant 0 : i32
    %c0_i32_1 = arith.constant 0 : i32
    return %c0_i32, %c0_i32_0 : i32, i32
  }
  func.func @transform_3(%arg0: i32) -> (i32, i32) {
    %c0_i32 = arith.constant 0 : i32
    %c0_i32_0 = arith.constant 0 : i32
    %c0_i32_1 = arith.constant 0 : i32
    return %c0_i32, %c0_i32_0 : i32, i32
  }
  func.func @transform_4(%arg0: i32) -> (i32, i32) {
    %c0_i32 = arith.constant 0 : i32
    %c0_i32_0 = arith.constant 0 : i32
    %c0_i32_1 = arith.constant 0 : i32
    return %c0_i32, %c0_i32_0 : i32, i32
  }
  func.func @transform_5(%arg0: i32) -> (i32, i32) {
    %c0_i32 = arith.constant 0 : i32
    %c0_i32_0 = arith.constant 0 : i32
    %c0_i32_1 = arith.constant 0 : i32
    return %c0_i32, %c0_i32_0 : i32, i32
  }
  func.func @transform_6(%arg0: i32) -> (i32, i32) {
    %c0_i32 = arith.constant 0 : i32
    %c0_i32_0 = arith.constant 0 : i32
    %c0_i32_1 = arith.constant 0 : i32
    return %c0_i32, %c0_i32_0 : i32, i32
  }
  func.func @transform_7(%arg0: i32) -> (i32, i32) {
    %c0_i32 = arith.constant 0 : i32
    %c0_i32_0 = arith.constant 0 : i32
    return %arg0, %c0_i32 : i32, i32
  }
}

module attributes {stable_mosaic.version = 11 : i64} {
  func.func @_mlp_kernel(%arg0: i32, %arg1: memref<8x32xf32, #tpu.memory_space<vmem>>, %arg2: memref<32x128xf32, #tpu.memory_space<vmem>>, %arg3: memref<1x128xf32, #tpu.memory_space<vmem>>, %arg4: memref<128x128xf32, #tpu.memory_space<vmem>>, %arg5: memref<1x128xf32, #tpu.memory_space<vmem>>, %arg6: memref<128x4xf32, #tpu.memory_space<vmem>>, %arg7: memref<1x4xf32, #tpu.memory_space<vmem>>, %arg8: memref<8x4xf32, #tpu.memory_space<vmem>>) attributes {dimension_semantics = [#tpu.dimension_semantics<parallel>], iteration_bounds = array<i64: 1>, scalar_prefetch = 0 : i64, scratch_operands = 0 : i64, tpu.core_type = #tpu.core_type<tc>, window_params = [{transform_indices = @transform_0, window_bounds = array<i64: 8, 32>}, {pipeline_mode = #tpu.pipeline_mode<synchronous>, transform_indices = @transform_1, window_bounds = array<i64: 32, 128>}, {pipeline_mode = #tpu.pipeline_mode<synchronous>, transform_indices = @transform_2, window_bounds = array<i64: 1, 128>}, {pipeline_mode = #tpu.pipeline_mode<synchronous>, transform_indices = @transform_3, window_bounds = array<i64: 128, 128>}, {pipeline_mode = #tpu.pipeline_mode<synchronous>, transform_indices = @transform_4, window_bounds = array<i64: 1, 128>}, {pipeline_mode = #tpu.pipeline_mode<synchronous>, transform_indices = @transform_5, window_bounds = array<i64: 128, 4>}, {pipeline_mode = #tpu.pipeline_mode<synchronous>, transform_indices = @transform_6, window_bounds = array<i64: 1, 4>}, {transform_indices = @transform_7, window_bounds = array<i64: 8, 4>}]} {
    %c0 = arith.constant 0 : index
    %c0_0 = arith.constant 0 : index
    %0 = vector.load %arg1[%c0, %c0_0] : memref<8x32xf32, #tpu.memory_space<vmem>>, vector<8x32xf32>
    %c0_1 = arith.constant 0 : index
    %c0_2 = arith.constant 0 : index
    %1 = vector.load %arg2[%c0_1, %c0_2] : memref<32x128xf32, #tpu.memory_space<vmem>>, vector<32x128xf32>
    %cst = arith.constant dense<0.000000e+00> : vector<8x128xf32>
    %2 = tpu.matmul %0, %1, %cst {dimension_numbers = #tpu.dot_dimension_numbers<[1], [0], [0], [1], [0, 0, 1, 1], [], []>} : vector<8x32xf32>, vector<32x128xf32>, vector<8x128xf32> -> vector<8x128xf32>
    %c0_3 = arith.constant 0 : index
    %c0_4 = arith.constant 0 : index
    %3 = vector.load %arg3[%c0_3, %c0_4] : memref<1x128xf32, #tpu.memory_space<vmem>>, vector<1x128xf32>
    %4 = vector.broadcast %3 : vector<1x128xf32> to vector<8x128xf32>
    %5 = arith.addf %2, %4 : vector<8x128xf32>
    %cst_5 = arith.constant 0.000000e+00 : f32
    %6 = vector.broadcast %cst_5 : f32 to vector<8x128xf32>
    %7 = arith.maximumf %5, %6 : vector<8x128xf32>
    %c0_6 = arith.constant 0 : index
    %c0_7 = arith.constant 0 : index
    %8 = vector.load %arg4[%c0_6, %c0_7] : memref<128x128xf32, #tpu.memory_space<vmem>>, vector<128x128xf32>
    %cst_8 = arith.constant dense<0.000000e+00> : vector<8x128xf32>
    %9 = tpu.matmul %7, %8, %cst_8 {dimension_numbers = #tpu.dot_dimension_numbers<[1], [0], [0], [1], [0, 0, 1, 1], [], []>} : vector<8x128xf32>, vector<128x128xf32>, vector<8x128xf32> -> vector<8x128xf32>
    %c0_9 = arith.constant 0 : index
    %c0_10 = arith.constant 0 : index
    %10 = vector.load %arg5[%c0_9, %c0_10] : memref<1x128xf32, #tpu.memory_space<vmem>>, vector<1x128xf32>
    %11 = vector.broadcast %10 : vector<1x128xf32> to vector<8x128xf32>
    %12 = arith.addf %9, %11 : vector<8x128xf32>
    %c0_11 = arith.constant 0 : index
    %c0_12 = arith.constant 0 : index
    %13 = vector.load %arg6[%c0_11, %c0_12] : memref<128x4xf32, #tpu.memory_space<vmem>>, vector<128x4xf32>
    %cst_13 = arith.constant dense<0.000000e+00> : vector<8x4xf32>
    %14 = tpu.matmul %12, %13, %cst_13 {dimension_numbers = #tpu.dot_dimension_numbers<[1], [0], [0], [1], [0, 0, 1, 1], [], []>} : vector<8x128xf32>, vector<128x4xf32>, vector<8x4xf32> -> vector<8x4xf32>
    %c0_14 = arith.constant 0 : index
    %c0_15 = arith.constant 0 : index
    %15 = vector.load %arg7[%c0_14, %c0_15] : memref<1x4xf32, #tpu.memory_space<vmem>>, vector<1x4xf32>
    %16 = vector.broadcast %15 : vector<1x4xf32> to vector<8x4xf32>
    %17 = arith.addf %14, %16 : vector<8x4xf32>
    %c0_16 = arith.constant 0 : index
    %c0_17 = arith.constant 0 : index
    %18 = vector.load %arg8[%c0_16, %c0_17] : memref<8x4xf32, #tpu.memory_space<vmem>>, vector<8x4xf32>
    tpu.vector_store %arg8[%c0_16, %c0_17], %17 {strides = array<i32>} : memref<8x4xf32, #tpu.memory_space<vmem>>, vector<8x4xf32>,
    return
  }
  func.func @transform_0(%arg0: i32) -> (i32, i32) {
    %c0_i32 = arith.constant 0 : i32
    %c0_i32_0 = arith.constant 0 : i32
    return %arg0, %c0_i32 : i32, i32
  }
  func.func @transform_1(%arg0: i32) -> (i32, i32) {
    %c0_i32 = arith.constant 0 : i32
    %c0_i32_0 = arith.constant 0 : i32
    %c0_i32_1 = arith.constant 0 : i32
    return %c0_i32, %c0_i32_0 : i32, i32
  }
  func.func @transform_2(%arg0: i32) -> (i32, i32) {
    %c0_i32 = arith.constant 0 : i32
    %c0_i32_0 = arith.constant 0 : i32
    %c0_i32_1 = arith.constant 0 : i32
    return %c0_i32, %c0_i32_0 : i32, i32
  }
  func.func @transform_3(%arg0: i32) -> (i32, i32) {
    %c0_i32 = arith.constant 0 : i32
    %c0_i32_0 = arith.constant 0 : i32
    %c0_i32_1 = arith.constant 0 : i32
    return %c0_i32, %c0_i32_0 : i32, i32
  }
  func.func @transform_4(%arg0: i32) -> (i32, i32) {
    %c0_i32 = arith.constant 0 : i32
    %c0_i32_0 = arith.constant 0 : i32
    %c0_i32_1 = arith.constant 0 : i32
    return %c0_i32, %c0_i32_0 : i32, i32
  }
  func.func @transform_5(%arg0: i32) -> (i32, i32) {
    %c0_i32 = arith.constant 0 : i32
    %c0_i32_0 = arith.constant 0 : i32
    %c0_i32_1 = arith.constant 0 : i32
    return %c0_i32, %c0_i32_0 : i32, i32
  }
  func.func @transform_6(%arg0: i32) -> (i32, i32) {
    %c0_i32 = arith.constant 0 : i32
    %c0_i32_0 = arith.constant 0 : i32
    %c0_i32_1 = arith.constant 0 : i32
    return %c0_i32, %c0_i32_0 : i32, i32
  }
  func.func @transform_7(%arg0: i32) -> (i32, i32) {
    %c0_i32 = arith.constant 0 : i32
    %c0_i32_0 = arith.constant 0 : i32
    return %arg0, %c0_i32 : i32, i32
  }
}

</mosaic_0001>

<llo_original>
// kernel: tpu_custom_call.1
$region0: #{tpu_custom_call.1}
  #allocation0 [shape = 'u32[]', space=smem, size = 0x4, offset = 0x4, fixed_abs, tag = 'smem constant byte address 0x4 - core index']
  #allocation1 [shape = 'u32[72,128]{1,0:T(1,128)}', space=vmem, size = 0x9000, scoped, tag = 'internal scratch']
  %s0 = inlined_call_operand.hbm [shape: f32[8,32], index: 0, kind: input, shape index: {}]
  %s1 = inlined_call_operand.hbm [shape: f32[32,128], index: 1, kind: input, shape index: {}]
  %s2 = inlined_call_operand.vmem [shape: f32[1,128], index: 2, kind: input, shape index: {}]
  %s3 = inlined_call_operand.vmem [shape: f32[128,128], index: 3, kind: input, shape index: {}]
  %s4 = inlined_call_operand.vmem [shape: f32[1,128], index: 4, kind: input, shape index: {}]
  %s5 = inlined_call_operand.vmem [shape: f32[128,4], index: 5, kind: input, shape index: {}]
  %s6 = inlined_call_operand.vmem [shape: f32[1,4], index: 6, kind: input, shape index: {}]
  %s7 = inlined_call_operand.vmem [shape: f32[8,4], index: 7, kind: output, shape index: {}]
  %s8 = sld [smem:[#allocation0]]
  $region46: #{tpu_custom_call.1} parent=0
    _
  %s10 = ssub.s32 1, %s8
  %s11 = scalar_select 0, %s10, %s8
  $region1: #{tpu_custom_call.1} parent=0
    #allocation2 [shape = 'u8[4096]{0}', space=vmem, size = 0x1000, scoped, tag = 'input window, operand 0, single buffered']
    #allocation3 [shape = 's32[1]{0}', space=sflag, size = 0x4, scoped, tag = 'scoped memory for tpu_custom_call.1']
    #allocation4 [shape = 'u8[16384]{0}', space=vmem, size = 0x4000, scoped, tag = 'input window, operand 1, single buffered']
    #allocation5 [shape = 's32[1]{0}', space=sflag, size = 0x4, scoped, tag = 'scoped memory for tpu_custom_call.1']
    %12 = vsyncpa [#allocation3], 0
    %13 = vsyncpa [#allocation5], 0
    // Predicated region
    $region2: #{tpu_custom_call.1} parent=1 // pred_check
      _
    $region3: #{tpu_custom_call.1} parent=1 // pred_check_branch
      %15 = sbr.rel (0) target = $region5
    $region4: #{tpu_custom_call.1} parent=1 // pred_region
      %17 = vsyncadd [#allocation3], 0
      %s19 = sshll.u32 %s0, 4
      %s20 = int_to_ptr.hbm [resolvable:$true] %s19
      %s21 = sshll.u32 [#allocation2], 4
      %s22 = int_to_ptr.vmem [resolvable:$true] %s21
      %24 = dma.hbm_to_vmem [thread:$0]  %s20, 128, %s22, [#allocation3]
    $region5: #{tpu_custom_call.1} parent=1 // pred_fallthru
      _
    // Predicated region
    $region6: #{tpu_custom_call.1} parent=1 // pred_check
      _
    $region7: #{tpu_custom_call.1} parent=1 // pred_check_branch
      %26 = sbr.rel (0) target = $region9
    $region8: #{tpu_custom_call.1} parent=1 // pred_region
      %28 = vsyncadd [#allocation5], 0
      %s29 = sshll.u32 %s1, 4
      %s30 = int_to_ptr.hbm [resolvable:$true] %s29
      %s31 = sshll.u32 [#allocation4], 4
      %s32 = int_to_ptr.vmem [resolvable:$true] %s31
      %37 = dma.hbm_to_vmem [thread:$0]  %s30, 512, %s32, [#allocation5], 128, 128, 8
    $region9: #{tpu_custom_call.1} parent=1 // pred_fallthru
      _
    // Predicated region
    $region10: #{tpu_custom_call.1} parent=1 // pred_check
      _
    $region11: #{tpu_custom_call.1} parent=1 // pred_check_branch
      %39 = sbr.rel (0) target = $region13
    $region12: #{tpu_custom_call.1} parent=1 // pred_region
      _
    $region13: #{tpu_custom_call.1} parent=1 // pred_fallthru
      _
    // Predicated region
    $region14: #{tpu_custom_call.1} parent=1 // pred_check
      _
    $region15: #{tpu_custom_call.1} parent=1 // pred_check_branch
      %41 = sbr.rel (0) target = $region17
    $region16: #{tpu_custom_call.1} parent=1 // pred_region
      _
    $region17: #{tpu_custom_call.1} parent=1 // pred_fallthru
      _
    // Predicated region
    $region18: #{tpu_custom_call.1} parent=1 // pred_check
      _
    $region19: #{tpu_custom_call.1} parent=1 // pred_check_branch
      %43 = sbr.rel (0) target = $region21
    $region20: #{tpu_custom_call.1} parent=1 // pred_region
      _
    $region21: #{tpu_custom_call.1} parent=1 // pred_fallthru
      _
    // Predicated region
    $region22: #{tpu_custom_call.1} parent=1 // pred_check
      _
    $region23: #{tpu_custom_call.1} parent=1 // pred_check_branch
      %45 = sbr.rel (0) target = $region25
    $region24: #{tpu_custom_call.1} parent=1 // pred_region
      _
    $region25: #{tpu_custom_call.1} parent=1 // pred_fallthru
      _
    // Predicated region
    $region26: #{tpu_custom_call.1} parent=1 // pred_check
      _
    $region27: #{tpu_custom_call.1} parent=1 // pred_check_branch
      %47 = sbr.rel (0) target = $region29
    $region28: #{tpu_custom_call.1} parent=1 // pred_region
      _
    $region29: #{tpu_custom_call.1} parent=1 // pred_fallthru
      _
    // Predicated region
    $region30: #{tpu_custom_call.1} parent=1 // pred_check
      _
    $region31: #{tpu_custom_call.1} parent=1 // pred_check_branch
      %49 = sbr.rel (0) target = $region33
    $region32: #{tpu_custom_call.1} parent=1 // pred_region
      %51 = dma.done [#allocation3], 128
    $region33: #{tpu_custom_call.1} parent=1 // pred_fallthru
      _
    // Predicated region
    $region34: #{tpu_custom_call.1} parent=1 // pred_check
      _
    $region35: #{tpu_custom_call.1} parent=1 // pred_check_branch
      %53 = sbr.rel (0) target = $region37
    $region36: #{tpu_custom_call.1} parent=1 // pred_region
      %55 = dma.done [#allocation5], 512
    $region37: #{tpu_custom_call.1} parent=1 // pred_fallthru
      _
    %v56 = vld [vmem:[#allocation2] sm:$0xff]
    %v57 = vld [vmem:[#allocation4] sm:$0xff]
    %v58 = vld [vmem:[#allocation4 + $0x8] sm:$0xff]
    %v59 = vld [vmem:[#allocation4 + $0x10] sm:$0xff]
    %v60 = vld [vmem:[#allocation4 + $0x18] sm:$0xff]
    %v61 = vld [vmem:[%s2] sm:$0x1]
    %v63 = vperm.slane %v61, 0
    %vm65 = vcmask 261120
    %v67 = vsel %vm65, %v56, 0
    %69 = vmatpush.msra.mxu0 0.0
    %70 = vmatpush.msra.mxu0 0.0
    %71 = vmatpush.msra.mxu0 0.0
    %72 = vmatpush.msra.mxu0 0.0
    %73 = vmatpush.msra.mxu0 0.0
    %74 = vmatpush.msra.mxu0 0.0
    %75 = vmatpush.msra.mxu0 0.0
    %76 = vmatpush.msra.mxu0 0.0
    %77 = vmatpush.msra.mxu0 0.0
    %78 = vmatpush.msra.mxu0 0.0
    %79 = vmatpush.msra.mxu0 0.0
    %80 = vmatpush.msra.mxu0 0.0
    %81 = vmatpush.msra.mxu0 %v60
    %82 = vmatpush.msra.mxu0 %v59
    %83 = vmatpush.msra.mxu0 %v58
    %84 = vmatpush.msra.mxu0 %v57
    %85 = vmatmul.f32.gmra.mxu0 %v67
    %v86 = vpop.f32.mrf.mxu0
    %v87 = vadd.f32 %v63, %v86
    %88 = vdwg.mxu0
    %v89 = vmax.f32 %v87, 0.0
    %v90 = vld [vmem:[%s3] sm:$0xff]
    %v91 = vld [vmem:[%s3 + $0x8] sm:$0xff]
    %v92 = vld [vmem:[%s3 + $0x10] sm:$0xff]
    %v93 = vld [vmem:[%s3 + $0x18] sm:$0xff]
    %v94 = vld [vmem:[%s3 + $0x20] sm:$0xff]
    %v95 = vld [vmem:[%s3 + $0x28] sm:$0xff]
    %v96 = vld [vmem:[%s3 + $0x30] sm:$0xff]
    %v97 = vld [vmem:[%s3 + $0x38] sm:$0xff]
    %v98 = vld [vmem:[%s3 + $0x40] sm:$0xff]
    %v99 = vld [vmem:[%s3 + $0x48] sm:$0xff]
    %v100 = vld [vmem:[%s3 + $0x50] sm:$0xff]
    %v101 = vld [vmem:[%s3 + $0x58] sm:$0xff]
    %v102 = vld [vmem:[%s3 + $0x60] sm:$0xff]
    %v103 = vld [vmem:[%s3 + $0x68] sm:$0xff]
    %v104 = vld [vmem:[%s3 + $0x70] sm:$0xff]
    %v105 = vld [vmem:[%s3 + $0x78] sm:$0xff]
    %v106 = vld [vmem:[%s4] sm:$0x1]
    %v108 = vperm.slane %v106, 0
    %110 = vmatpush.msra.mxu0 %v105
    %111 = vmatpush.msra.mxu0 %v104
    %112 = vmatpush.msra.mxu0 %v103
    %113 = vmatpush.msra.mxu0 %v102
    %114 = vmatpush.msra.mxu0 %v101
    %115 = vmatpush.msra.mxu0 %v100
    %116 = vmatpush.msra.mxu0 %v99
    %117 = vmatpush.msra.mxu0 %v98
    %118 = vmatpush.msra.mxu0 %v97
    %119 = vmatpush.msra.mxu0 %v96
    %120 = vmatpush.msra.mxu0 %v95
    %121 = vmatpush.msra.mxu0 %v94
    %122 = vmatpush.msra.mxu0 %v93
    %123 = vmatpush.msra.mxu0 %v92
    %124 = vmatpush.msra.mxu0 %v91
    %125 = vmatpush.msra.mxu0 %v90
    %126 = vmatmul.f32.gmra.mxu0 %v89
    %v127 = vpop.f32.mrf.mxu0
    %v128 = vadd.f32 %v108, %v127
    %129 = vdwg.mxu0
    %v130 = vld [vmem:[%s5] sm:$0xff]
    %v131 = vld [vmem:[%s5 + $0x8] sm:$0xff]
    %v132 = vld [vmem:[%s5 + $0x10] sm:$0xff]
    %v133 = vld [vmem:[%s5 + $0x18] sm:$0xff]
    %v134 = vld [vmem:[%s5 + $0x20] sm:$0xff]
    %v135 = vld [vmem:[%s5 + $0x28] sm:$0xff]
    %v136 = vld [vmem:[%s5 + $0x30] sm:$0xff]
    %v137 = vld [vmem:[%s5 + $0x38] sm:$0xff]
    %v138 = vld [vmem:[%s5 + $0x40] sm:$0xff]
    %v139 = vld [vmem:[%s5 + $0x48] sm:$0xff]
    %v140 = vld [vmem:[%s5 + $0x50] sm:$0xff]
    %v141 = vld [vmem:[%s5 + $0x58] sm:$0xff]
    %v142 = vld [vmem:[%s5 + $0x60] sm:$0xff]
    %v143 = vld [vmem:[%s5 + $0x68] sm:$0xff]
    %v144 = vld [vmem:[%s5 + $0x70] sm:$0xff]
    %v145 = vld [vmem:[%s5 + $0x78] sm:$0xff]
    %v146 = vld [vmem:[%s6] sm:$0x1]
    %v148 = vperm.slane %v146, 0
    %150 = vmatpush.msra.mxu0 %v145
    %151 = vmatpush.msra.mxu0 %v144
    %152 = vmatpush.msra.mxu0 %v143
    %153 = vmatpush.msra.mxu0 %v142
    %154 = vmatpush.msra.mxu0 %v141
    %155 = vmatpush.msra.mxu0 %v140
    %156 = vmatpush.msra.mxu0 %v139
    %157 = vmatpush.msra.mxu0 %v138
    %158 = vmatpush.msra.mxu0 %v137
    %159 = vmatpush.msra.mxu0 %v136
    %160 = vmatpush.msra.mxu0 %v135
    %161 = vmatpush.msra.mxu0 %v134
    %162 = vmatpush.msra.mxu0 %v133
    %163 = vmatpush.msra.mxu0 %v132
    %164 = vmatpush.msra.mxu0 %v131
    %165 = vmatpush.msra.mxu0 %v130
    %166 = vmatmul.f32.gmra.mxu0 %v128
    %v167 = vpop.f32.mrf.mxu0
    %v168 = vadd.f32 %v148, %v167
    %169 = vdwg.mxu0
    %vm170 = vcmask 31744
    %171 = vst.msk [vmem:[%s7] sm:$0xff] %vm170, %v168
    // Predicated region
    $region38: #{tpu_custom_call.1} parent=1 // pred_check
      _
    $region39: #{tpu_custom_call.1} parent=1 // pred_check_branch
      %173 = sbr.rel (0) target = $region41
    $region40: #{tpu_custom_call.1} parent=1 // pred_region
      _
    $region41: #{tpu_custom_call.1} parent=1 // pred_fallthru
      _
    // Predicated region
    $region42: #{tpu_custom_call.1} parent=1 // pred_check
      _
    $region43: #{tpu_custom_call.1} parent=1 // pred_check_branch
      %175 = sbr.rel (0) target = $region45
    $region44: #{tpu_custom_call.1} parent=1 // pred_region
      _
    $region45: #{tpu_custom_call.1} parent=1 // pred_fallthru
      _
    %176 = vsyncpa [#allocation3], 1
    %177 = vsyncpa [#allocation5], 1

// kernel: tpu_custom_call.1
$region0: #{tpu_custom_call.1}
  #allocation0 [shape = 'u32[]', space=smem, size = 0x4, offset = 0x4, fixed_abs, tag = 'smem constant byte address 0x4 - core index']
  #allocation1 [shape = 'u32[72,128]{1,0:T(1,128)}', space=vmem, size = 0x9000, scoped, tag = 'internal scratch']
  %s0 = inlined_call_operand.hbm [shape: f32[8,32], index: 0, kind: input, shape index: {}]
  %s1 = inlined_call_operand.hbm [shape: f32[32,128], index: 1, kind: input, shape index: {}]
  %s2 = inlined_call_operand.vmem [shape: f32[1,128], index: 2, kind: input, shape index: {}]
  %s3 = inlined_call_operand.vmem [shape: f32[128,128], index: 3, kind: input, shape index: {}]
  %s4 = inlined_call_operand.vmem [shape: f32[1,128], index: 4, kind: input, shape index: {}]
  %s5 = inlined_call_operand.vmem [shape: f32[128,4], index: 5, kind: input, shape index: {}]
  %s6 = inlined_call_operand.vmem [shape: f32[1,4], index: 6, kind: input, shape index: {}]
  %s7 = inlined_call_operand.vmem [shape: f32[8,4], index: 7, kind: output, shape index: {}]
  %s8 = sld [smem:[#allocation0]]
  $region46: #{tpu_custom_call.1} parent=0
    _
  %s10 = ssub.s32 1, %s8
  %s11 = scalar_select 0, %s10, %s8
  $region1: #{tpu_custom_call.1} parent=0
    #allocation2 [shape = 'u8[4096]{0}', space=vmem, size = 0x1000, scoped, tag = 'input window, operand 0, single buffered']
    #allocation3 [shape = 's32[1]{0}', space=sflag, size = 0x4, scoped, tag = 'scoped memory for tpu_custom_call.1']
    #allocation4 [shape = 'u8[16384]{0}', space=vmem, size = 0x4000, scoped, tag = 'input window, operand 1, single buffered']
    #allocation5 [shape = 's32[1]{0}', space=sflag, size = 0x4, scoped, tag = 'scoped memory for tpu_custom_call.1']
    %12 = vsyncpa [#allocation3], 0
    %13 = vsyncpa [#allocation5], 0
    // Predicated region
    $region2: #{tpu_custom_call.1} parent=1 // pred_check
      _
    $region3: #{tpu_custom_call.1} parent=1 // pred_check_branch
      %15 = sbr.rel (0) target = $region5
    $region4: #{tpu_custom_call.1} parent=1 // pred_region
      %17 = vsyncadd [#allocation3], 0
      %s19 = sshll.u32 %s0, 4
      %s20 = int_to_ptr.hbm [resolvable:$true] %s19
      %s21 = sshll.u32 [#allocation2], 4
      %s22 = int_to_ptr.vmem [resolvable:$true] %s21
      %24 = dma.hbm_to_vmem [thread:$0]  %s20, 128, %s22, [#allocation3]
    $region5: #{tpu_custom_call.1} parent=1 // pred_fallthru
      _
    // Predicated region
    $region6: #{tpu_custom_call.1} parent=1 // pred_check
      _
    $region7: #{tpu_custom_call.1} parent=1 // pred_check_branch
      %26 = sbr.rel (0) target = $region9
    $region8: #{tpu_custom_call.1} parent=1 // pred_region
      %28 = vsyncadd [#allocation5], 0
      %s29 = sshll.u32 %s1, 4
      %s30 = int_to_ptr.hbm [resolvable:$true] %s29
      %s31 = sshll.u32 [#allocation4], 4
      %s32 = int_to_ptr.vmem [resolvable:$true] %s31
      %37 = dma.hbm_to_vmem [thread:$0]  %s30, 512, %s32, [#allocation5], 128, 128, 8
    $region9: #{tpu_custom_call.1} parent=1 // pred_fallthru
      _
    // Predicated region
    $region10: #{tpu_custom_call.1} parent=1 // pred_check
      _
    $region11: #{tpu_custom_call.1} parent=1 // pred_check_branch
      %39 = sbr.rel (0) target = $region13
    $region12: #{tpu_custom_call.1} parent=1 // pred_region
      _
    $region13: #{tpu_custom_call.1} parent=1 // pred_fallthru
      _
    // Predicated region
    $region14: #{tpu_custom_call.1} parent=1 // pred_check
      _
    $region15: #{tpu_custom_call.1} parent=1 // pred_check_branch
      %41 = sbr.rel (0) target = $region17
    $region16: #{tpu_custom_call.1} parent=1 // pred_region
      _
    $region17: #{tpu_custom_call.1} parent=1 // pred_fallthru
      _
    // Predicated region
    $region18: #{tpu_custom_call.1} parent=1 // pred_check
      _
    $region19: #{tpu_custom_call.1} parent=1 // pred_check_branch
      %43 = sbr.rel (0) target = $region21
    $region20: #{tpu_custom_call.1} parent=1 // pred_region
      _
    $region21: #{tpu_custom_call.1} parent=1 // pred_fallthru
      _
    // Predicated region
    $region22: #{tpu_custom_call.1} parent=1 // pred_check
      _
    $region23: #{tpu_custom_call.1} parent=1 // pred_check_branch
      %45 = sbr.rel (0) target = $region25
    $region24: #{tpu_custom_call.1} parent=1 // pred_region
      _
    $region25: #{tpu_custom_call.1} parent=1 // pred_fallthru
      _
    // Predicated region
    $region26: #{tpu_custom_call.1} parent=1 // pred_check
      _
    $region27: #{tpu_custom_call.1} parent=1 // pred_check_branch
      %47 = sbr.rel (0) target = $region29
    $region28: #{tpu_custom_call.1} parent=1 // pred_region
      _
    $region29: #{tpu_custom_call.1} parent=1 // pred_fallthru
      _
    // Predicated region
    $region30: #{tpu_custom_call.1} parent=1 // pred_check
      _
    $region31: #{tpu_custom_call.1} parent=1 // pred_check_branch
      %49 = sbr.rel (0) target = $region33
    $region32: #{tpu_custom_call.1} parent=1 // pred_region
      %51 = dma.done [#allocation3], 128
    $region33: #{tpu_custom_call.1} parent=1 // pred_fallthru
      _
    // Predicated region
    $region34: #{tpu_custom_call.1} parent=1 // pred_check
      _
    $region35: #{tpu_custom_call.1} parent=1 // pred_check_branch
      %53 = sbr.rel (0) target = $region37
    $region36: #{tpu_custom_call.1} parent=1 // pred_region
      %55 = dma.done [#allocation5], 512
    $region37: #{tpu_custom_call.1} parent=1 // pred_fallthru
      _
    %v56 = vld [vmem:[#allocation2] sm:$0xff]
    %v57 = vld [vmem:[#allocation4] sm:$0xff]
    %v58 = vld [vmem:[#allocation4 + $0x8] sm:$0xff]
    %v59 = vld [vmem:[#allocation4 + $0x10] sm:$0xff]
    %v60 = vld [vmem:[#allocation4 + $0x18] sm:$0xff]
    %v61 = vld [vmem:[%s2] sm:$0x1]
    %v63 = vperm.slane %v61, 0
    %vm65 = vcmask 261120
    %v67 = vsel %vm65, %v56, 0
    %69 = vmatpush.msra.mxu0 0.0
    %70 = vmatpush.msra.mxu0 0.0
    %71 = vmatpush.msra.mxu0 0.0
    %72 = vmatpush.msra.mxu0 0.0
    %73 = vmatpush.msra.mxu0 0.0
    %74 = vmatpush.msra.mxu0 0.0
    %75 = vmatpush.msra.mxu0 0.0
    %76 = vmatpush.msra.mxu0 0.0
    %77 = vmatpush.msra.mxu0 0.0
    %78 = vmatpush.msra.mxu0 0.0
    %79 = vmatpush.msra.mxu0 0.0
    %80 = vmatpush.msra.mxu0 0.0
    %81 = vmatpush.msra.mxu0 %v60
    %82 = vmatpush.msra.mxu0 %v59
    %83 = vmatpush.msra.mxu0 %v58
    %84 = vmatpush.msra.mxu0 %v57
    %85 = vmatmul.f32.gmra.mxu0 %v67
    %v86 = vpop.f32.mrf.mxu0
    %v87 = vadd.f32 %v63, %v86
    %88 = vdwg.mxu0
    %v89 = vmax.f32 %v87, 0.0
    %v90 = vld [vmem:[%s3] sm:$0xff]
    %v91 = vld [vmem:[%s3 + $0x8] sm:$0xff]
    %v92 = vld [vmem:[%s3 + $0x10] sm:$0xff]
    %v93 = vld [vmem:[%s3 + $0x18] sm:$0xff]
    %v94 = vld [vmem:[%s3 + $0x20] sm:$0xff]
    %v95 = vld [vmem:[%s3 + $0x28] sm:$0xff]
    %v96 = vld [vmem:[%s3 + $0x30] sm:$0xff]
    %v97 = vld [vmem:[%s3 + $0x38] sm:$0xff]
    %v98 = vld [vmem:[%s3 + $0x40] sm:$0xff]
    %v99 = vld [vmem:[%s3 + $0x48] sm:$0xff]
    %v100 = vld [vmem:[%s3 + $0x50] sm:$0xff]
    %v101 = vld [vmem:[%s3 + $0x58] sm:$0xff]
    %v102 = vld [vmem:[%s3 + $0x60] sm:$0xff]
    %v103 = vld [vmem:[%s3 + $0x68] sm:$0xff]
    %v104 = vld [vmem:[%s3 + $0x70] sm:$0xff]
    %v105 = vld [vmem:[%s3 + $0x78] sm:$0xff]
    %v106 = vld [vmem:[%s4] sm:$0x1]
    %v108 = vperm.slane %v106, 0
    %110 = vmatpush.msra.mxu0 %v105
    %111 = vmatpush.msra.mxu0 %v104
    %112 = vmatpush.msra.mxu0 %v103
    %113 = vmatpush.msra.mxu0 %v102
    %114 = vmatpush.msra.mxu0 %v101
    %115 = vmatpush.msra.mxu0 %v100
    %116 = vmatpush.msra.mxu0 %v99
    %117 = vmatpush.msra.mxu0 %v98
    %118 = vmatpush.msra.mxu0 %v97
    %119 = vmatpush.msra.mxu0 %v96
    %120 = vmatpush.msra.mxu0 %v95
    %121 = vmatpush.msra.mxu0 %v94
    %122 = vmatpush.msra.mxu0 %v93
    %123 = vmatpush.msra.mxu0 %v92
    %124 = vmatpush.msra.mxu0 %v91
    %125 = vmatpush.msra.mxu0 %v90
    %126 = vmatmul.f32.gmra.mxu0 %v89
    %v127 = vpop.f32.mrf.mxu0
    %v128 = vadd.f32 %v108, %v127
    %129 = vdwg.mxu0
    %v130 = vld [vmem:[%s5] sm:$0xff]
    %v131 = vld [vmem:[%s5 + $0x8] sm:$0xff]
    %v132 = vld [vmem:[%s5 + $0x10] sm:$0xff]
    %v133 = vld [vmem:[%s5 + $0x18] sm:$0xff]
    %v134 = vld [vmem:[%s5 + $0x20] sm:$0xff]
    %v135 = vld [vmem:[%s5 + $0x28] sm:$0xff]
    %v136 = vld [vmem:[%s5 + $0x30] sm:$0xff]
    %v137 = vld [vmem:[%s5 + $0x38] sm:$0xff]
    %v138 = vld [vmem:[%s5 + $0x40] sm:$0xff]
    %v139 = vld [vmem:[%s5 + $0x48] sm:$0xff]
    %v140 = vld [vmem:[%s5 + $0x50] sm:$0xff]
    %v141 = vld [vmem:[%s5 + $0x58] sm:$0xff]
    %v142 = vld [vmem:[%s5 + $0x60] sm:$0xff]
    %v143 = vld [vmem:[%s5 + $0x68] sm:$0xff]
    %v144 = vld [vmem:[%s5 + $0x70] sm:$0xff]
    %v145 = vld [vmem:[%s5 + $0x78] sm:$0xff]
    %v146 = vld [vmem:[%s6] sm:$0x1]
    %v148 = vperm.slane %v146, 0
    %150 = vmatpush.msra.mxu0 %v145
    %151 = vmatpush.msra.mxu0 %v144
    %152 = vmatpush.msra.mxu0 %v143
    %153 = vmatpush.msra.mxu0 %v142
    %154 = vmatpush.msra.mxu0 %v141
    %155 = vmatpush.msra.mxu0 %v140
    %156 = vmatpush.msra.mxu0 %v139
    %157 = vmatpush.msra.mxu0 %v138
    %158 = vmatpush.msra.mxu0 %v137
    %159 = vmatpush.msra.mxu0 %v136
    %160 = vmatpush.msra.mxu0 %v135
    %161 = vmatpush.msra.mxu0 %v134
    %162 = vmatpush.msra.mxu0 %v133
    %163 = vmatpush.msra.mxu0 %v132
    %164 = vmatpush.msra.mxu0 %v131
    %165 = vmatpush.msra.mxu0 %v130
    %166 = vmatmul.f32.gmra.mxu0 %v128
    %v167 = vpop.f32.mrf.mxu0
    %v168 = vadd.f32 %v148, %v167
    %169 = vdwg.mxu0
    %vm170 = vcmask 31744
    %171 = vst.msk [vmem:[%s7] sm:$0xff] %vm170, %v168
    // Predicated region
    $region38: #{tpu_custom_call.1} parent=1 // pred_check
      _
    $region39: #{tpu_custom_call.1} parent=1 // pred_check_branch
      %173 = sbr.rel (0) target = $region41
    $region40: #{tpu_custom_call.1} parent=1 // pred_region
      _
    $region41: #{tpu_custom_call.1} parent=1 // pred_fallthru
      _
    // Predicated region
    $region42: #{tpu_custom_call.1} parent=1 // pred_check
      _
    $region43: #{tpu_custom_call.1} parent=1 // pred_check_branch
      %175 = sbr.rel (0) target = $region45
    $region44: #{tpu_custom_call.1} parent=1 // pred_region
      _
    $region45: #{tpu_custom_call.1} parent=1 // pred_fallthru
      _
    %176 = vsyncpa [#allocation3], 1
    %177 = vsyncpa [#allocation5], 1

</llo_original>
